<compile_context>
chip_gen: v6e
topology: v6e:2x2x1
jax: 0.10.0
libtpu: 0.0.40
codegen_flags: <defaults>
</compile_context>

<pallas_src>
import functools

import jax
import jax.numpy as jnp
from jax.experimental import pallas as pl
from jax.experimental.pallas import tpu as pltpu


def _round_up(x, m):
    return (x + m - 1) // m * m


def sampler_kernel(x_ref, w1_ref, b1_ref, wh_ref, bh_ref, eps_ref,
                   z_ref, kld_ref, *, hp, tm, batch):
    """One batch tile: (tm, Fp) -> z (tm, Hp), kld partial row (1, Hp)."""
    compute_dtype = w1_ref.dtype

    # mlp1 + relu  (bf16 MXU matmul, f32 accumulate, f32 elementwise)
    h = jnp.dot(x_ref[...], w1_ref[...], preferred_element_type=jnp.float32)
    encode = jnp.maximum(h + b1_ref[...], 0.0)                    # (tm, Hp) f32

    # fused mu | logvar heads: one matmul with N = 2*Hp
    heads = jnp.dot(encode.astype(compute_dtype), wh_ref[...],
                    preferred_element_type=jnp.float32) + bh_ref[...]
    mu = heads[:, :hp]                                            # (tm, Hp)
    logvar = heads[:, hp:]                                        # (tm, Hp)

    # reparameterization
    std = jnp.exp(0.5 * logvar)
    z_ref[...] = eps_ref[...] * std + mu

    # KL term: sum(mu^2 + exp(logvar) - 1 - logvar); exp(logvar) == std*std
    terms = mu * mu + std * std - 1.0 - logvar
    # mask batch-padding rows (padded x rows are zero but relu(b1) makes
    # mu/logvar nonzero there, so they must not contribute to the sum)
    rows = (jax.lax.broadcasted_iota(jnp.int32, (tm, hp), 0)
            + pl.program_id(0) * tm)
    terms = jnp.where(rows < batch, terms, 0.0)
    # lane-dense partial: reduce over the batch rows only (sublane reduce),
    # leave the 128-wide lane axis for the wrapper to sum.
    kld_ref[...] = jnp.sum(terms, axis=0, keepdims=True)          # (1, Hp)


def sampler_forward(x, params, eps, *, compute_dtype=jnp.bfloat16):
    """x: (B, F) f32; params: pre-transposed weights (in, out); eps: (B, H) f32."""
    B, F = x.shape
    H = params["w1"].shape[1]

    # lane-dense padded shapes
    Fp = _round_up(max(F, 128), 128)
    Hp = _round_up(max(H, 128), 128)
    tm = min(256, _round_up(B, 8))          # batch tile (rows)
    Bp = _round_up(B, tm)
    n_tiles = Bp // tm

    def pad2(a, shape):
        return jnp.pad(a, ((0, shape[0] - a.shape[0]), (0, shape[1] - a.shape[1])))

    x_p = pad2(x, (Bp, Fp)).astype(compute_dtype)
    eps_p = pad2(eps, (Bp, Hp)).astype(jnp.float32)
    w1_p = pad2(params["w1"], (Fp, Hp)).astype(compute_dtype)
    b1_p = pad2(params["b1"], (1, Hp)).astype(jnp.float32)
    # fuse the two head layers into a single (Hp, 2*Hp) weight / (1, 2*Hp) bias
    w_heads = jnp.concatenate(
        [pad2(params["wmu"], (Hp, Hp)), pad2(params["wvar"], (Hp, Hp))],
        axis=1).astype(compute_dtype)
    b_heads = jnp.concatenate(
        [pad2(params["bmu"], (1, Hp)), pad2(params["bvar"], (1, Hp))],
        axis=1).astype(jnp.float32)

    kernel = functools.partial(sampler_kernel, hp=Hp, tm=tm, batch=B)

    z_p, kld_part = pl.pallas_call(
        kernel,
        out_shape=(
            jax.ShapeDtypeStruct((Bp, Hp), jnp.float32),       # z (padded)
            jax.ShapeDtypeStruct((n_tiles, Hp), jnp.float32),  # KLD partials
        ),
        grid=(n_tiles,),
        in_specs=[
            pl.BlockSpec((tm, Fp), lambda i: (i, 0)),          # x tile
            pl.BlockSpec((Fp, Hp), lambda i: (0, 0)),          # w1 (resident)
            pl.BlockSpec((1, Hp), lambda i: (0, 0)),           # b1 (resident)
            pl.BlockSpec((Hp, 2 * Hp), lambda i: (0, 0)),      # fused heads W
            pl.BlockSpec((1, 2 * Hp), lambda i: (0, 0)),       # fused heads b
            pl.BlockSpec((tm, Hp), lambda i: (i, 0)),          # eps tile
        ],
        out_specs=(
            pl.BlockSpec((tm, Hp), lambda i: (i, 0)),          # z tile
            pl.BlockSpec((1, Hp), lambda i: (i, 0)),           # KLD partial row
        ),
        compiler_params=pltpu.CompilerParams(
            dimension_semantics=("parallel",)),                # megacore on v7x
    )(x_p, w1_p, b1_p, w_heads, b_heads, eps_p)

    # TODO(synk): for much larger F/H, add a K (reduction) grid axis so the
    # weight tiles fit v7x's 64 MiB VMEM instead of keeping them fully resident.
    return z_p[:B, :H], jnp.sum(kld_part)


def init_params(key, feature_size, hidden_size):
    """Deterministic synthetic init (PyTorch-Linear-like uniform bounds)."""
    ks = jax.random.split(key, 6)

    def lin(kw, kb, fan_in, fan_out):
        bound = 1.0 / jnp.sqrt(fan_in)
        w = jax.random.uniform(kw, (fan_in, fan_out), jnp.float32, -bound, bound)
        b = jax.random.uniform(kb, (1, fan_out), jnp.float32, -bound, bound)
        return w, b

    w1, b1 = lin(ks[0], ks[1], feature_size, hidden_size)
    wmu, bmu = lin(ks[2], ks[3], hidden_size, hidden_size)
    wvar, bvar = lin(ks[4], ks[5], hidden_size, hidden_size)
    return {"w1": w1, "b1": b1, "wmu": wmu, "bmu": bmu, "wvar": wvar, "bvar": bvar}


def reference_forward(x, params, eps, compute_dtype=jnp.bfloat16):
    """Pure-JAX reference using the same bf16-in / f32-accumulate numerics."""
    cd = compute_dtype
    w1 = params["w1"].astype(cd)
    wmu = params["wmu"].astype(cd)
    wvar = params["wvar"].astype(cd)
    h = jnp.maximum(
        jnp.dot(x.astype(cd), w1, preferred_element_type=jnp.float32)
        + params["b1"], 0.0)
    hc = h.astype(cd)
    mu = jnp.dot(hc, wmu, preferred_element_type=jnp.float32) + params["bmu"]
    logvar = jnp.dot(hc, wvar, preferred_element_type=jnp.float32) + params["bvar"]
    std = jnp.exp(0.5 * logvar)
    z = eps * std + mu
    kld_s = jnp.sum(mu ** 2 + jnp.exp(logvar) - 1.0 - logvar)
    return z, kld_s


if __name__ == "__main__":
    feature_size, hidden_size, batch = 16, 32, 8
    key = jax.random.PRNGKey(0)
    k_params, k_x, k_eps = jax.random.split(key, 3)

    params = init_params(k_params, feature_size, hidden_size)
    x = jax.random.normal(k_x, (batch, feature_size), jnp.float32)
    # eps supplied explicitly so the kernel is deterministic (torch.randn_like).
    eps = jax.random.normal(k_eps, (batch, hidden_size), jnp.float32)

    z, kld = sampler_forward(x, params, eps)
    jax.block_until_ready((z, kld))

    z_ref, kld_ref = reference_forward(x, params, eps)
    assert z.shape == (batch, hidden_size)
    assert jnp.allclose(z, z_ref, atol=5e-3, rtol=5e-3), (
        float(jnp.max(jnp.abs(z - z_ref))))
    assert jnp.allclose(kld, kld_ref, atol=5e-2, rtol=5e-3), (
        float(kld), float(kld_ref))

    print("KERNEL_OK")
</pallas_src>

<mosaic_0001>
module attributes {stable_mosaic.version = 11 : i64} {
  func.func @sampler_kernel(%arg0: i32, %arg1: memref<8x128xbf16, #tpu.memory_space<vmem>>, %arg2: memref<128x128xbf16, #tpu.memory_space<vmem>>, %arg3: memref<1x128xf32, #tpu.memory_space<vmem>>, %arg4: memref<128x256xbf16, #tpu.memory_space<vmem>>, %arg5: memref<1x256xf32, #tpu.memory_space<vmem>>, %arg6: memref<8x128xf32, #tpu.memory_space<vmem>>, %arg7: memref<8x128xf32, #tpu.memory_space<vmem>>, %arg8: memref<1x128xf32, #tpu.memory_space<vmem>>) attributes {dimension_semantics = [#tpu.dimension_semantics<parallel>], iteration_bounds = array<i64: 1>, scalar_prefetch = 0 : i64, scratch_operands = 0 : i64, tpu.core_type = #tpu.core_type<tc>, window_params = [{transform_indices = @transform_0, window_bounds = array<i64: 8, 128>}, {pipeline_mode = #tpu.pipeline_mode<synchronous>, transform_indices = @transform_1, window_bounds = array<i64: 128, 128>}, {pipeline_mode = #tpu.pipeline_mode<synchronous>, transform_indices = @transform_2, window_bounds = array<i64: 1, 128>}, {pipeline_mode = #tpu.pipeline_mode<synchronous>, transform_indices = @transform_3, window_bounds = array<i64: 128, 256>}, {pipeline_mode = #tpu.pipeline_mode<synchronous>, transform_indices = @transform_4, window_bounds = array<i64: 1, 256>}, {transform_indices = @transform_5, window_bounds = array<i64: 8, 128>}, {transform_indices = @transform_6, window_bounds = array<i64: 8, 128>}, {transform_indices = @transform_7, window_bounds = array<i64: 1, 128>}]} {
    %c0 = arith.constant 0 : index
    %c0_0 = arith.constant 0 : index
    %0 = vector.load %arg1[%c0, %c0_0] : memref<8x128xbf16, #tpu.memory_space<vmem>>, vector<8x128xbf16>
    %c0_1 = arith.constant 0 : index
    %c0_2 = arith.constant 0 : index
    %1 = vector.load %arg2[%c0_1, %c0_2] : memref<128x128xbf16, #tpu.memory_space<vmem>>, vector<128x128xbf16>
    %cst = arith.constant dense<0.000000e+00> : vector<8x128xf32>
    %2 = tpu.matmul %0, %1, %cst {dimension_numbers = #tpu.dot_dimension_numbers<[1], [0], [0], [1], [0, 0, 1, 1], [], []>} : vector<8x128xbf16>, vector<128x128xbf16>, vector<8x128xf32> -> vector<8x128xf32>
    %c0_3 = arith.constant 0 : index
    %c0_4 = arith.constant 0 : index
    %3 = vector.load %arg3[%c0_3, %c0_4] : memref<1x128xf32, #tpu.memory_space<vmem>>, vector<1x128xf32>
    %4 = vector.broadcast %3 : vector<1x128xf32> to vector<8x128xf32>
    %5 = arith.addf %2, %4 : vector<8x128xf32>
    %cst_5 = arith.constant 0.000000e+00 : f32
    %6 = vector.broadcast %cst_5 : f32 to vector<8x128xf32>
    %7 = arith.maximumf %5, %6 : vector<8x128xf32>
    %8 = arith.truncf %7 : vector<8x128xf32> to vector<8x128xbf16>
    %c0_6 = arith.constant 0 : index
    %c0_7 = arith.constant 0 : index
    %9 = vector.load %arg4[%c0_6, %c0_7] : memref<128x256xbf16, #tpu.memory_space<vmem>>, vector<128x256xbf16>
    %cst_8 = arith.constant dense<0.000000e+00> : vector<8x256xf32>
    %10 = tpu.matmul %8, %9, %cst_8 {dimension_numbers = #tpu.dot_dimension_numbers<[1], [0], [0], [1], [0, 0, 1, 1], [], []>} : vector<8x128xbf16>, vector<128x256xbf16>, vector<8x256xf32> -> vector<8x256xf32>
    %c0_9 = arith.constant 0 : index
    %c0_10 = arith.constant 0 : index
    %11 = vector.load %arg5[%c0_9, %c0_10] : memref<1x256xf32, #tpu.memory_space<vmem>>, vector<1x256xf32>
    %12 = vector.broadcast %11 : vector<1x256xf32> to vector<8x256xf32>
    %13 = arith.addf %10, %12 : vector<8x256xf32>
    %14 = vector.extract_strided_slice %13 {offsets = [0, 0], sizes = [8, 128], strides = [1, 1]} : vector<8x256xf32> to vector<8x128xf32>
    %15 = vector.extract_strided_slice %13 {offsets = [0, 128], sizes = [8, 128], strides = [1, 1]} : vector<8x256xf32> to vector<8x128xf32>
    %cst_11 = arith.constant 5.000000e-01 : f32
    %16 = vector.broadcast %cst_11 : f32 to vector<8x128xf32>
    %17 = arith.mulf %16, %15 : vector<8x128xf32>
    %18 = math.exp %17 : vector<8x128xf32>
    %c0_12 = arith.constant 0 : index
    %c0_13 = arith.constant 0 : index
    %19 = vector.load %arg6[%c0_12, %c0_13] : memref<8x128xf32, #tpu.memory_space<vmem>>, vector<8x128xf32>
    %20 = arith.mulf %19, %18 : vector<8x128xf32>
    %21 = arith.addf %20, %14 : vector<8x128xf32>
    %c0_14 = arith.constant 0 : index
    %c0_15 = arith.constant 0 : index
    %22 = vector.load %arg7[%c0_14, %c0_15] : memref<8x128xf32, #tpu.memory_space<vmem>>, vector<8x128xf32>
    tpu.vector_store %arg7[%c0_14, %c0_15], %21 {strides = array<i32>} : memref<8x128xf32, #tpu.memory_space<vmem>>, vector<8x128xf32>,
    %23 = arith.mulf %14, %14 : vector<8x128xf32>
    %24 = arith.mulf %18, %18 : vector<8x128xf32>
    %25 = arith.addf %23, %24 : vector<8x128xf32>
    %cst_16 = arith.constant 1.000000e+00 : f32
    %26 = vector.broadcast %cst_16 : f32 to vector<8x128xf32>
    %27 = arith.subf %25, %26 : vector<8x128xf32>
    %28 = arith.subf %27, %15 : vector<8x128xf32>
    %29 = tpu.iota {dimensions = array<i32: 0>} : vector<8x128xi32>
    %c8_i32 = arith.constant 8 : i32
    %30 = arith.muli %arg0, %c8_i32 : i32
    %31 = vector.broadcast %30 : i32 to vector<8x128xi32>
    %32 = arith.addi %29, %31 : vector<8x128xi32>
    %c8_i32_17 = arith.constant 8 : i32
    %33 = vector.broadcast %c8_i32_17 : i32 to vector<8x128xi32>
    %34 = arith.cmpi slt, %32, %33 : vector<8x128xi32>
    %cst_18 = arith.constant 0.000000e+00 : f32
    %35 = vector.broadcast %cst_18 : f32 to vector<8x128xf32>
    %36 = arith.select %34, %28, %35 : vector<8x128xi1>, vector<8x128xf32>
    %cst_19 = arith.constant dense<0.000000e+00> : vector<128xf32>
    %37 = vector.multi_reduction <add>, %36, %cst_19 [0] : vector<8x128xf32> to vector<128xf32>
    %38 = vector.shape_cast %37 : vector<128xf32> to vector<1x128xf32>
    %c0_20 = arith.constant 0 : index
    %c0_21 = arith.constant 0 : index
    %39 = vector.load %arg8[%c0_20, %c0_21] : memref<1x128xf32, #tpu.memory_space<vmem>>, vector<1x128xf32>
    tpu.vector_store %arg8[%c0_20, %c0_21], %38 {strides = array<i32>} : memref<1x128xf32, #tpu.memory_space<vmem>>, vector<1x128xf32>,
    return
  }
  func.func @transform_0(%arg0: i32) -> (i32, i32) {
    %c0_i32 = arith.constant 0 : i32
    %c0_i32_0 = arith.constant 0 : i32
    return %arg0, %c0_i32 : i32, i32
  }
  func.func @transform_1(%arg0: i32) -> (i32, i32) {
    %c0_i32 = arith.constant 0 : i32
    %c0_i32_0 = arith.constant 0 : i32
    %c0_i32_1 = arith.constant 0 : i32
    return %c0_i32, %c0_i32_0 : i32, i32
  }
  func.func @transform_2(%arg0: i32) -> (i32, i32) {
    %c0_i32 = arith.constant 0 : i32
    %c0_i32_0 = arith.constant 0 : i32
    %c0_i32_1 = arith.constant 0 : i32
    return %c0_i32, %c0_i32_0 : i32, i32
  }
  func.func @transform_3(%arg0: i32) -> (i32, i32) {
    %c0_i32 = arith.constant 0 : i32
    %c0_i32_0 = arith.constant 0 : i32
    %c0_i32_1 = arith.constant 0 : i32
    return %c0_i32, %c0_i32_0 : i32, i32
  }
  func.func @transform_4(%arg0: i32) -> (i32, i32) {
    %c0_i32 = arith.constant 0 : i32
    %c0_i32_0 = arith.constant 0 : i32
    %c0_i32_1 = arith.constant 0 : i32
    return %c0_i32, %c0_i32_0 : i32, i32
  }
  func.func @transform_5(%arg0: i32) -> (i32, i32) {
    %c0_i32 = arith.constant 0 : i32
    %c0_i32_0 = arith.constant 0 : i32
    return %arg0, %c0_i32 : i32, i32
  }
  func.func @transform_6(%arg0: i32) -> (i32, i32) {
    %c0_i32 = arith.constant 0 : i32
    %c0_i32_0 = arith.constant 0 : i32
    return %arg0, %c0_i32 : i32, i32
  }
  func.func @transform_7(%arg0: i32) -> (i32, i32) {
    %c0_i32 = arith.constant 0 : i32
    %c0_i32_0 = arith.constant 0 : i32
    return %arg0, %c0_i32 : i32, i32
  }
}

</mosaic_0001>

<llo_original>
// kernel: tpu_custom_call.1
$region0: #{tpu_custom_call.1}
  #allocation0 [shape = 'u32[]', space=smem, size = 0x4, offset = 0x4, fixed_abs, tag = 'smem constant byte address 0x4 - core index']
  #allocation1 [shape = 'u32[144,128]{1,0:T(1,128)}', space=vmem, size = 0x12000, scoped, tag = 'internal scratch']
  %s0 = inlined_call_operand.hbm [shape: bf16[8,128], index: 0, kind: input, shape index: {}]
  %s1 = inlined_call_operand.hbm [shape: bf16[128,128], index: 1, kind: input, shape index: {}]
  %s2 = inlined_call_operand.vmem [shape: f32[1,128], index: 2, kind: input, shape index: {}]
  %s3 = inlined_call_operand.hbm [shape: bf16[128,256], index: 3, kind: input, shape index: {}]
  %s4 = inlined_call_operand.hbm [shape: f32[1,256], index: 4, kind: input, shape index: {}]
  %s5 = inlined_call_operand.vmem [shape: f32[8,128], index: 5, kind: input, shape index: {}]
  %s6 = inlined_call_operand.hbm [shape: f32[8,128], index: 6, kind: output, shape index: {0}]
  %s7 = inlined_call_operand.hbm [shape: f32[1,128], index: 7, kind: output, shape index: {1}]
  %8 = xla_tuple %s6, %s7
  %s9 = sld [smem:[#allocation0]]
  $region58: #{tpu_custom_call.1} parent=0
    _
  %s11 = ssub.s32 1, %s9
  %s12 = scalar_select 0, %s11, %s9
  $region1: #{tpu_custom_call.1} parent=0
    #allocation2 [shape = 'u8[2048]{0}', space=vmem, size = 0x800, scoped, tag = 'input window, operand 0, single buffered']
    #allocation3 [shape = 's32[1]{0}', space=sflag, size = 0x4, scoped, tag = 'scoped memory for tpu_custom_call.1']
    #allocation4 [shape = 's32[1]{0}', space=sflag, size = 0x4, scoped, tag = 'scoped memory for tpu_custom_call.1']
    #allocation5 [shape = 'u8[32768]{0}', space=vmem, size = 0x8000, scoped, tag = 'input window, operand 1, single buffered']
    #allocation6 [shape = 's32[1]{0}', space=sflag, size = 0x4, scoped, tag = 'scoped memory for tpu_custom_call.1']
    #allocation7 [shape = 'u8[65536]{0}', space=vmem, size = 0x10000, scoped, tag = 'input window, operand 3, single buffered']
    #allocation8 [shape = 'u8[1024]{0}', space=vmem, size = 0x400, scoped, tag = 'input window, operand 4, single buffered']
    #allocation9 [shape = 's32[1]{0}', space=sflag, size = 0x4, scoped, tag = 'scoped memory for tpu_custom_call.1']
    #allocation10 [shape = 'u8[4096]{0}', space=vmem, size = 0x1000, scoped, tag = 'output window, operand 0, single buffered']
    #allocation11 [shape = 'u8[512]{0}', space=vmem, size = 0x400, scoped, tag = 'output window, operand 1, single buffered']
    #allocation12 [shape = 's32[1]{0}', space=sflag, size = 0x4, scoped, tag = 'scoped memory for tpu_custom_call.1']
    %13 = vsyncpa [#allocation3], 0
    %14 = vsyncpa [#allocation6], 0
    %15 = vsyncpa [#allocation9], 0
    %16 = vsyncpa [#allocation4], 0
    %17 = vsyncpa [#allocation12], 0
    // Predicated region
    $region2: #{tpu_custom_call.1} parent=1 // pred_check
      _
    $region3: #{tpu_custom_call.1} parent=1 // pred_check_branch
      %19 = sbr.rel (0) target = $region5
    $region4: #{tpu_custom_call.1} parent=1 // pred_region
      %s21 = ssub.s32 64, 64
      %22 = vsyncadd [#allocation3], %s21
      %s24 = sshll.u32 [#allocation2], 4
      %s25 = int_to_ptr.vmem [resolvable:$true] %s24
      %27 = dma.hbm_to_vmem [thread:$0]  %s0, 64, %s25, [#allocation3]
    $region5: #{tpu_custom_call.1} parent=1 // pred_fallthru
      _
    // Predicated region
    $region6: #{tpu_custom_call.1} parent=1 // pred_check
      _
    $region7: #{tpu_custom_call.1} parent=1 // pred_check_branch
      %29 = sbr.rel (0) target = $region9
    $region8: #{tpu_custom_call.1} parent=1 // pred_region
      %s31 = ssub.s32 1024, 1024
      %32 = vsyncadd [#allocation6], %s31
      %s33 = sshll.u32 [#allocation5], 4
      %s34 = int_to_ptr.vmem [resolvable:$true] %s33
      %39 = dma.hbm_to_vmem [thread:$0]  %s1, 1024, %s34, [#allocation6], 64, 64, 4
    $region9: #{tpu_custom_call.1} parent=1 // pred_fallthru
      _
    // Predicated region
    $region10: #{tpu_custom_call.1} parent=1 // pred_check
      _
    $region11: #{tpu_custom_call.1} parent=1 // pred_check_branch
      %41 = sbr.rel (0) target = $region13
    $region12: #{tpu_custom_call.1} parent=1 // pred_region
      _
    $region13: #{tpu_custom_call.1} parent=1 // pred_fallthru
      _
    // Predicated region
    $region14: #{tpu_custom_call.1} parent=1 // pred_check
      _
    $region15: #{tpu_custom_call.1} parent=1 // pred_check_branch
      %43 = sbr.rel (0) target = $region17
    $region16: #{tpu_custom_call.1} parent=1 // pred_region
      %s45 = ssub.s32 2048, 2048
      %46 = vsyncadd [#allocation6], %s45
      %s47 = sshll.u32 [#allocation7], 4
      %s48 = int_to_ptr.vmem [resolvable:$true] %s47
      %53 = dma.hbm_to_vmem [thread:$0]  %s3, 2048, %s48, [#allocation6], 128, 128, 8
    $region17: #{tpu_custom_call.1} parent=1 // pred_fallthru
      _
    // Predicated region
    $region18: #{tpu_custom_call.1} parent=1 // pred_check
      _
    $region19: #{tpu_custom_call.1} parent=1 // pred_check_branch
      %55 = sbr.rel (0) target = $region21
    $region20: #{tpu_custom_call.1} parent=1 // pred_region
      %s57 = ssub.s32 32, 32
      %58 = vsyncadd [#allocation9], %s57
      %s60 = sshll.u32 [#allocation8], 4
      %s61 = int_to_ptr.vmem [resolvable:$true] %s60
      %63 = dma.hbm_to_vmem [thread:$0]  %s4, 32, %s61, [#allocation9]
    $region21: #{tpu_custom_call.1} parent=1 // pred_fallthru
      _
    // Predicated region
    $region22: #{tpu_custom_call.1} parent=1 // pred_check
      _
    $region23: #{tpu_custom_call.1} parent=1 // pred_check_branch
      %65 = sbr.rel (0) target = $region25
    $region24: #{tpu_custom_call.1} parent=1 // pred_region
      _
    $region25: #{tpu_custom_call.1} parent=1 // pred_fallthru
      _
    // Predicated region
    $region26: #{tpu_custom_call.1} parent=1 // pred_check
      _
    $region27: #{tpu_custom_call.1} parent=1 // pred_check_branch
      %67 = sbr.rel (0) target = $region29
    $region28: #{tpu_custom_call.1} parent=1 // pred_region
      %68 = dma.done [#allocation3], 64
    $region29: #{tpu_custom_call.1} parent=1 // pred_fallthru
      _
    // Predicated region
    $region30: #{tpu_custom_call.1} parent=1 // pred_check
      _
    $region31: #{tpu_custom_call.1} parent=1 // pred_check_branch
      %70 = sbr.rel (0) target = $region33
    $region32: #{tpu_custom_call.1} parent=1 // pred_region
      %71 = dma.done [#allocation6], 1024
    $region33: #{tpu_custom_call.1} parent=1 // pred_fallthru
      _
    // Predicated region
    $region34: #{tpu_custom_call.1} parent=1 // pred_check
      _
    $region35: #{tpu_custom_call.1} parent=1 // pred_check_branch
      %73 = sbr.rel (0) target = $region37
    $region36: #{tpu_custom_call.1} parent=1 // pred_region
      %74 = dma.done [#allocation6], 2048
    $region37: #{tpu_custom_call.1} parent=1 // pred_fallthru
      _
    // Predicated region
    $region38: #{tpu_custom_call.1} parent=1 // pred_check
      _
    $region39: #{tpu_custom_call.1} parent=1 // pred_check_branch
      %76 = sbr.rel (0) target = $region41
    $region40: #{tpu_custom_call.1} parent=1 // pred_region
      %77 = dma.done [#allocation9], 32
    $region41: #{tpu_custom_call.1} parent=1 // pred_fallthru
      _
    %v79 = vld [vmem:[#allocation2] sm:$0xf]
    %v80 = vld [vmem:[#allocation5] sm:$0xf]
    %v81 = vld [vmem:[#allocation5 + $0x4] sm:$0xf]
    %v82 = vld [vmem:[#allocation5 + $0x8] sm:$0xf]
    %v83 = vld [vmem:[#allocation5 + $0xc] sm:$0xf]
    %v84 = vld [vmem:[#allocation5 + $0x10] sm:$0xf]
    %v85 = vld [vmem:[#allocation5 + $0x14] sm:$0xf]
    %v86 = vld [vmem:[#allocation5 + $0x18] sm:$0xf]
    %v87 = vld [vmem:[#allocation5 + $0x1c] sm:$0xf]
    %v88 = vld [vmem:[#allocation5 + $0x20] sm:$0xf]
    %v89 = vld [vmem:[#allocation5 + $0x24] sm:$0xf]
    %v90 = vld [vmem:[#allocation5 + $0x28] sm:$0xf]
    %v91 = vld [vmem:[#allocation5 + $0x2c] sm:$0xf]
    %v92 = vld [vmem:[#allocation5 + $0x30] sm:$0xf]
    %v93 = vld [vmem:[#allocation5 + $0x34] sm:$0xf]
    %v94 = vld [vmem:[#allocation5 + $0x38] sm:$0xf]
    %v95 = vld [vmem:[#allocation5 + $0x3c] sm:$0xf]
    %v96 = vld [vmem:[%s2] sm:$0x1]
    %v98 = vlaneseq
    %v99 = vshrl.u32 %v98, 7
    %v100 = vsub.s32 0, %v99
    %v101 = vrot.slane %v96, %v100
    %v119 = vunpack.c.l.b16 %v80
    %v120 = vunpack.c.l.b16 %v81
    %v121 = vunpack.c.l.b16 %v82
    %v122 = vunpack.c.l.b16 %v83
    %v123 = vunpack.c.l.b16 %v84
    %v124 = vunpack.c.l.b16 %v85
    %v125 = vunpack.c.l.b16 %v86
    %v126 = vunpack.c.l.b16 %v87
    %v127 = vunpack.c.l.b16 %v88
    %v128 = vunpack.c.l.b16 %v89
    %v129 = vunpack.c.l.b16 %v90
    %v130 = vunpack.c.l.b16 %v91
    %v131 = vunpack.c.l.b16 %v92
    %v132 = vunpack.c.l.b16 %v93
    %v133 = vunpack.c.l.b16 %v94
    %v134 = vunpack.c.l.b16 %v95
    %v135 = vpack.c.b16 %v120, %v119
    %v136 = vpack.c.b16 %v122, %v121
    %v137 = vpack.c.b16 %v124, %v123
    %v138 = vpack.c.b16 %v126, %v125
    %v139 = vpack.c.b16 %v128, %v127
    %v140 = vpack.c.b16 %v130, %v129
    %v141 = vpack.c.b16 %v132, %v131
    %v142 = vpack.c.b16 %v134, %v133
    %151 = vmatprep.subr.bf16.mxu0 0
    %152 = vmatpush1.bf16.msra.mxu0 %v142
    %153 = vmatprep.subr.bf16.mxu0 0
    %154 = vmatpush1.bf16.msra.mxu0 %v141
    %155 = vmatprep.subr.bf16.mxu0 0
    %156 = vmatpush1.bf16.msra.mxu0 %v140
    %157 = vmatprep.subr.bf16.mxu0 0
    %158 = vmatpush1.bf16.msra.mxu0 %v139
    %159 = vmatprep.subr.bf16.mxu0 0
    %160 = vmatpush1.bf16.msra.mxu0 %v138
    %161 = vmatprep.subr.bf16.mxu0 0
    %162 = vmatpush1.bf16.msra.mxu0 %v137
    %163 = vmatprep.subr.bf16.mxu0 0
    %164 = vmatpush1.bf16.msra.mxu0 %v136
    %165 = vmatprep.subr.bf16.mxu0 0
    %166 = vmatpush1.bf16.msra.mxu0 %v135
    %167 = vmatprep.subr.bf16.mxu0 0
    %168 = vmatpush2.bf16.msra.mxu0 0
    %169 = vmatprep.subr.bf16.mxu0 0
    %170 = vmatpush2.bf16.msra.mxu0 0
    %171 = vmatprep.subr.bf16.mxu0 0
    %172 = vmatpush2.bf16.msra.mxu0 0
    %173 = vmatprep.subr.bf16.mxu0 0
    %174 = vmatpush2.bf16.msra.mxu0 0
    %175 = vmatprep.subr.bf16.mxu0 0
    %176 = vmatpush2.bf16.msra.mxu0 0
    %177 = vmatprep.subr.bf16.mxu0 0
    %178 = vmatpush2.bf16.msra.mxu0 0
    %179 = vmatprep.subr.bf16.mxu0 0
    %180 = vmatpush2.bf16.msra.mxu0 0
    %181 = vmatprep.subr.bf16.mxu0 0
    %182 = vmatpush2.bf16.msra.mxu0 0
    %183 = vmatprep.mubr.bf16.mxu0 0
    %184 = vmatmul.mubr.bf16.gmra.mxu0 %v79
    %v185 = vpop.f32.mrf.mxu0
    %v186 = vadd.f32 %v101, %v185
    %v187 = vpop.f32.mrf.mxu0
    %v188 = vpop.f32.mrf.mxu0
    %v189 = vpop.f32.mrf.mxu0
    %190 = vdwg.mxu0
    %v191 = vmax.f32 %v186, 0.0
    %v192 = vpack.c.bf16 %v191, %v191
    %v193 = vld [vmem:[#allocation7] sm:$0xff]
    %v194 = vld [vmem:[#allocation7 + $0x8] sm:$0xff]
    %v195 = vld [vmem:[#allocation7 + $0x10] sm:$0xff]
    %v196 = vld [vmem:[#allocation7 + $0x18] sm:$0xff]
    %v197 = vld [vmem:[#allocation7 + $0x20] sm:$0xff]
    %v198 = vld [vmem:[#allocation7 + $0x28] sm:$0xff]
    %v199 = vld [vmem:[#allocation7 + $0x30] sm:$0xff]
    %v200 = vld [vmem:[#allocation7 + $0x38] sm:$0xff]
    %v201 = vld [vmem:[#allocation7 + $0x40] sm:$0xff]
    %v202 = vld [vmem:[#allocation7 + $0x48] sm:$0xff]
    %v203 = vld [vmem:[#allocation7 + $0x50] sm:$0xff]
    %v204 = vld [vmem:[#allocation7 + $0x58] sm:$0xff]
    %v205 = vld [vmem:[#allocation7 + $0x60] sm:$0xff]
    %v206 = vld [vmem:[#allocation7 + $0x68] sm:$0xff]
    %v207 = vld [vmem:[#allocation7 + $0x70] sm:$0xff]
    %v208 = vld [vmem:[#allocation7 + $0x78] sm:$0xff]
    %v209 = vld [vmem:[#allocation8] sm:$0x3]
    %v211 = vlaneseq
    %v212 = vshrl.u32 %v211, 7
    %v213 = vsub.s32 0, %v212
    %v214 = vrot.slane %v209, %v213
    %v215 = vlaneseq
    %v216 = vshrl.u32 %v215, 7
    %v217 = vsub.s32 1, %v216
    %v218 = vrot.slane %v209, %v217
    %v237 = vunpack.c.l.b16 %v193
    %v238 = vunpack.c.h.b16 %v193
    %v239 = vunpack.c.l.b16 %v194
    %v240 = vunpack.c.h.b16 %v194
    %v241 = vunpack.c.l.b16 %v195
    %v242 = vunpack.c.h.b16 %v195
    %v243 = vunpack.c.l.b16 %v196
    %v244 = vunpack.c.h.b16 %v196
    %v245 = vunpack.c.l.b16 %v197
    %v246 = vunpack.c.h.b16 %v197
    %v247 = vunpack.c.l.b16 %v198
    %v248 = vunpack.c.h.b16 %v198
    %v249 = vunpack.c.l.b16 %v199
    %v250 = vunpack.c.h.b16 %v199
    %v251 = vunpack.c.l.b16 %v200
    %v252 = vunpack.c.h.b16 %v200
    %v253 = vunpack.c.l.b16 %v201
    %v254 = vunpack.c.h.b16 %v201
    %v255 = vunpack.c.l.b16 %v202
    %v256 = vunpack.c.h.b16 %v202
    %v257 = vunpack.c.l.b16 %v203
    %v258 = vunpack.c.h.b16 %v203
    %v259 = vunpack.c.l.b16 %v204
    %v260 = vunpack.c.h.b16 %v204
    %v261 = vunpack.c.l.b16 %v205
    %v262 = vunpack.c.h.b16 %v205
    %v263 = vunpack.c.l.b16 %v206
    %v264 = vunpack.c.h.b16 %v206
    %v265 = vunpack.c.l.b16 %v207
    %v266 = vunpack.c.h.b16 %v207
    %v267 = vunpack.c.l.b16 %v208
    %v268 = vunpack.c.h.b16 %v208
    %v269 = vpack.c.b16 %v239, %v237
    %v270 = vpack.c.b16 %v240, %v238
    %v271 = vpack.c.b16 %v243, %v241
    %v272 = vpack.c.b16 %v244, %v242
    %v273 = vpack.c.b16 %v247, %v245
    %v274 = vpack.c.b16 %v248, %v246
    %v275 = vpack.c.b16 %v251, %v249
    %v276 = vpack.c.b16 %v252, %v250
    %v277 = vpack.c.b16 %v255, %v253
    %v278 = vpack.c.b16 %v256, %v254
    %v279 = vpack.c.b16 %v259, %v257
    %v280 = vpack.c.b16 %v260, %v258
    %v281 = vpack.c.b16 %v263, %v261
    %v282 = vpack.c.b16 %v264, %v262
    %v283 = vpack.c.b16 %v267, %v265
    %v284 = vpack.c.b16 %v268, %v266
    %301 = vmatprep.subr.bf16.mxu0 %v284
    %302 = vmatpush1.bf16.msra.mxu0 %v283
    %303 = vmatprep.subr.bf16.mxu0 %v282
    %304 = vmatpush1.bf16.msra.mxu0 %v281
    %305 = vmatprep.subr.bf16.mxu0 %v280
    %306 = vmatpush1.bf16.msra.mxu0 %v279
    %307 = vmatprep.subr.bf16.mxu0 %v278
    %308 = vmatpush1.bf16.msra.mxu0 %v277
    %309 = vmatprep.subr.bf16.mxu0 %v276
    %310 = vmatpush1.bf16.msra.mxu0 %v275
    %311 = vmatprep.subr.bf16.mxu0 %v274
    %312 = vmatpush1.bf16.msra.mxu0 %v273
    %313 = vmatprep.subr.bf16.mxu0 %v272
    %314 = vmatpush1.bf16.msra.mxu0 %v271
    %315 = vmatprep.subr.bf16.mxu0 %v270
    %316 = vmatpush1.bf16.msra.mxu0 %v269
    %317 = vmatprep.subr.bf16.mxu0 0
    %318 = vmatpush2.bf16.msra.mxu0 0
    %319 = vmatprep.subr.bf16.mxu0 0
    %320 = vmatpush2.bf16.msra.mxu0 0
    %321 = vmatprep.subr.bf16.mxu0 0
    %322 = vmatpush2.bf16.msra.mxu0 0
    %323 = vmatprep.subr.bf16.mxu0 0
    %324 = vmatpush2.bf16.msra.mxu0 0
    %325 = vmatprep.subr.bf16.mxu0 0
    %326 = vmatpush2.bf16.msra.mxu0 0
    %327 = vmatprep.subr.bf16.mxu0 0
    %328 = vmatpush2.bf16.msra.mxu0 0
    %329 = vmatprep.subr.bf16.mxu0 0
    %330 = vmatpush2.bf16.msra.mxu0 0
    %331 = vmatprep.subr.bf16.mxu0 0
    %332 = vmatpush2.bf16.msra.mxu0 0
    %333 = vmatprep.mubr.bf16.mxu0 0
    %334 = vmatmul.mubr.bf16.gmra.mxu0 %v192
    %v335 = vpop.f32.mrf.mxu0
    %v336 = vadd.f32 %v214, %v335
    %v337 = vpop.f32.mrf.mxu0
    %v338 = vadd.f32 %v218, %v337
    %v339 = vpop.f32.mrf.mxu0
    %v340 = vpop.f32.mrf.mxu0
    %341 = vdwg.mxu0
    %v342 = vmul.f32 %v338, 0.5
    %v343 = vmul.f32 %v342, 1.442695
    %v344 = vpow.pop %v343
    %v345 = vld [vmem:[%s5] sm:$0xff]
    %v346 = vmul.f32 %v345, %v344
    %v347 = vadd.f32 %v346, %v336
    %348 = vst [vmem:[#allocation10] sm:$0xff] %v347
    %v349 = vmul.f32 %v336, %v336
    %v350 = vmul.f32 %v344, %v344
    %v351 = vadd.f32 %v349, %v350
    %v352 = vsub.f32 %v351, 1.0
    %v353 = vsub.f32 %v352, %v338
    %v354 = vlaneseq
    %v355 = vshrl.u32 %v354, 7
    %s356 = smul.u32 0, 8
    %v357 = vstv %s356
    %v358 = vadd.s32 %v355, %v357
    %vm359 = vcmp.lt.s32.totalorder %v358, 8
    %v360 = vsel %vm359, %v353, 0.0
    %v361 = vrot.slane %v360, 4
    %v362 = vadd.f32 %v360, %v361
    %v363 = vrot.slane %v362, 2
    %v364 = vadd.f32 %v362, %v363
    %v365 = vrot.slane %v364, 1
    %v366 = vadd.f32 %v364, %v365
    %367 = vst [vmem:[#allocation11] sm:$0x1] %v366
    // Predicated region
    $region42: #{tpu_custom_call.1} parent=1 // pred_check
      _
    $region43: #{tpu_custom_call.1} parent=1 // pred_check_branch
      %369 = sbr.rel (0) target = $region45
    $region44: #{tpu_custom_call.1} parent=1 // pred_region
      %s371 = ssub.s32 128, 128
      %372 = vsyncadd [#allocation4], %s371
      %s374 = sshll.u32 [#allocation10], 4
      %s375 = int_to_ptr.vmem [resolvable:$true] %s374
      %377 = dma.vmem_to_hbm [thread:$0]  %s375, 128, %s6, [#allocation4]
    $region45: #{tpu_custom_call.1} parent=1 // pred_fallthru
      _
    // Predicated region
    $region46: #{tpu_custom_call.1} parent=1 // pred_check
      _
    $region47: #{tpu_custom_call.1} parent=1 // pred_check_branch
      %379 = sbr.rel (0) target = $region49
    $region48: #{tpu_custom_call.1} parent=1 // pred_region
      %s381 = ssub.s32 16, 16
      %382 = vsyncadd [#allocation12], %s381
      %s384 = sshll.u32 [#allocation11], 4
      %s385 = int_to_ptr.vmem [resolvable:$true] %s384
      %387 = dma.vmem_to_hbm [thread:$0]  %s385, 16, %s7, [#allocation12]
    $region49: #{tpu_custom_call.1} parent=1 // pred_fallthru
      _
    // Predicated region
    $region50: #{tpu_custom_call.1} parent=1 // pred_check
      _
    $region51: #{tpu_custom_call.1} parent=1 // pred_check_branch
      %389 = sbr.rel (0) target = $region53
    $region52: #{tpu_custom_call.1} parent=1 // pred_region
      %390 = dma.done [#allocation4], 128
    $region53: #{tpu_custom_call.1} parent=1 // pred_fallthru
      _
    // Predicated region
    $region54: #{tpu_custom_call.1} parent=1 // pred_check
      _
    $region55: #{tpu_custom_call.1} parent=1 // pred_check_branch
      %392 = sbr.rel (0) target = $region57
    $region56: #{tpu_custom_call.1} parent=1 // pred_region
      %393 = dma.done [#allocation12], 16
    $region57: #{tpu_custom_call.1} parent=1 // pred_fallthru
      _
    %394 = vsyncpa [#allocation3], 1
    %395 = vsyncpa [#allocation6], 1
    %396 = vsyncpa [#allocation9], 1
    %397 = vsyncpa [#allocation4], 1
    %398 = vsyncpa [#allocation12], 1

</llo_original>
